<compile_context>
chip_gen: v7x
topology: tpu7x:2x2x1
jax: 0.10.0
libtpu: 0.0.40
codegen_flags: <defaults>
</compile_context>

<pallas_src>
import functools

import jax
import jax.numpy as jnp
from jax import lax
from jax.experimental import pallas as pl
from jax.experimental.pallas import tpu as pltpu

BN_EPS = 1e-5


def _bottleneck_kernel(x_ref, w1_ref, b1_ref, w2_ref, b2_ref, w3_ref, b3_ref,
                       mask_ref, o_ref, *, W):
    """One block of images, laid out channels x (images * padded spatial).

    x_ref:    (Cin, L) f32, L = images_per_step * HWp (lane axis).
    w*_ref:   BN-folded matmul weights in bf16.
    b*_ref:   per-channel f32 biases, shape (C, 1) (minor cost; kept as simple
              lane-broadcast adds rather than folded into the matmuls).
    mask_ref: (9, 1, L) f32 border masks -- zero wherever a 3x3 tap falls
              outside its own HxW image (including the per-image lane padding),
              which makes the cyclic lane rolls below exactly equal to
              zero-padding, with no wrap leakage between images.
    """
    x = x_ref[...]                                              # (Cin, L) f32

    # --- conv1 (1x1) + bn1 + relu: one bf16 MXU matmul, f32 accumulate. ------
    out1 = jnp.dot(w1_ref[...], x.astype(jnp.bfloat16),
                   preferred_element_type=jnp.float32)
    out1 = jnp.maximum(out1 + b1_ref[...], 0.0)                 # (Cp, L) f32
    L = out1.shape[1]

    # --- conv2 (3x3, stride 1, pad 1) + bn2 + relu ----------------------------
    # Tap (kh, kw) reads out1 shifted by d = (kh-1)*W + (kw-1) along the
    # flattened spatial (lane) axis; a cyclic roll (XLU slot) + precomputed
    # border mask reproduces zero padding exactly.  All 9 taps are stacked into
    # a single (9*Cp, L) operand so the whole conv is ONE K=9*Cp MXU matmul.
    # Rolls/masks run in f32 (robust lowering path); the stack is cast to bf16
    # once, right before the matmul.
    patches = []
    for t in range(9):
        kh, kw = t // 3, t % 3
        d = (kh - 1) * W + (kw - 1)
        if d == 0:
            patches.append(out1)                                # center tap: never OOB
        else:
            patches.append(pltpu.roll(out1, shift=(-d) % L, axis=1) * mask_ref[t])
    stacked = jnp.concatenate(patches, axis=0)                  # (9*Cp, L) f32
    out2 = jnp.dot(w2_ref[...], stacked.astype(jnp.bfloat16),
                   preferred_element_type=jnp.float32)
    out2 = jnp.maximum(out2 + b2_ref[...], 0.0)                 # (Cp, L) f32

    # --- conv3 (1x1) + bn3, identity residual, no_relu=True ------------------
    out3 = jnp.dot(w3_ref[...], out2.astype(jnp.bfloat16),
                   preferred_element_type=jnp.float32)
    o_ref[...] = (out3 + b3_ref[...] + x).astype(o_ref.dtype)   # (Cout, L)


def _round_up(x, m):
    return ((x + m - 1) // m) * m


def _default_vmem_limit_bytes():
    """~96 MiB on 128-MiB-VMEM parts (v5e/v6e); 32 MiB on 64-MiB v7x."""
    try:
        cap = int(getattr(pltpu.get_tpu_info(), "vmem_capacity_bytes"))
    except Exception:
        cap = 64 * 1024 * 1024            # unknown part: assume the small one
    if cap >= 128 * 1024 * 1024:
        return 96 * 1024 * 1024
    return 32 * 1024 * 1024


def _choose_images_per_step(N, HWp):
    """Widen the matmul lane axis (target ~4096 lanes/step) while keeping at
    least 2 'parallel' grid steps when N >= 2 (v7x has 2 TensorCores)."""
    nb = min(N, max(1, 4096 // HWp))
    if N >= 2:
        nb = min(nb, N // 2)
    nb = max(nb, 1)
    while N % nb:                         # must evenly divide the batch
        nb -= 1
    return nb


def bottleneck_forward(x_nchw, folded_params, *, images_per_step=None,
                       vmem_limit_bytes=None):
    """x_nchw: (N, Cin, H, W) -> (N, Cout, H, W); Cout == Cin (identity residual)."""
    w1m, b1, w2m, b2, w3m, b3 = folded_params
    N, Cin, H, W = x_nchw.shape
    HW = H * W
    HWp = _round_up(HW, 128)              # lane-dense per-image slot
    Cp = w1m.shape[0]                     # padded mid-channel count
    Cout = w3m.shape[0]
    assert Cout == Cin, (
        "identity residual (downsample=None) requires conv3 output channels "
        "== in_channels")

    nb = _choose_images_per_step(N, HWp) if images_per_step is None else images_per_step
    assert N % nb == 0, "images_per_step must divide the batch size"
    grid = (N // nb,)
    Lb = nb * HWp                         # lane width per grid step

    # NCHW -> (C, N*HWp): channels on sublanes, (image, spatial) on lanes.
    # Pure layout plumbing, done once in XLA outside the kernel.
    x = x_nchw.reshape(N, Cin, HW)
    if HWp != HW:
        x = jnp.pad(x, ((0, 0), (0, 0), (0, HWp - HW)))
    x = jnp.transpose(x, (1, 0, 2)).reshape(Cin, N * HWp)

    masks = conv2_border_masks(H, W, HWp, nb)                   # (9, 1, Lb) f32

    kernel = functools.partial(_bottleneck_kernel, W=W)

    out = pl.pallas_call(
        kernel,
        out_shape=jax.ShapeDtypeStruct((Cout, N * HWp), x_nchw.dtype),
        grid_spec=pltpu.PrefetchScalarGridSpec(
            num_scalar_prefetch=0,
            grid=grid,
            in_specs=[
                pl.BlockSpec((Cin, Lb), lambda g: (0, g)),      # activations
                pl.BlockSpec((Cp, Cin), lambda g: (0, 0)),      # w1 (resident)
                pl.BlockSpec((Cp, 1), lambda g: (0, 0)),        # b1
                pl.BlockSpec((Cp, 9 * Cp), lambda g: (0, 0)),   # w2 (stacked taps)
                pl.BlockSpec((Cp, 1), lambda g: (0, 0)),        # b2
                pl.BlockSpec((Cout, Cp), lambda g: (0, 0)),     # w3
                pl.BlockSpec((Cout, 1), lambda g: (0, 0)),      # b3
                pl.BlockSpec((9, 1, Lb), lambda g: (0, 0, 0)),  # border masks
            ],
            out_specs=pl.BlockSpec((Cout, Lb), lambda g: (0, g)),
        ),
        compiler_params=pltpu.CompilerParams(
            dimension_semantics=("parallel",),      # image blocks independent
            vmem_limit_bytes=(vmem_limit_bytes if vmem_limit_bytes is not None
                              else _default_vmem_limit_bytes()),
        ),
    )(x, w1m, b1, w2m, b2, w3m, b3, masks)

    out = out.reshape(Cout, N, HWp)[:, :, :HW]
    return jnp.transpose(out, (1, 0, 2)).reshape(N, Cout, H, W)


def fold_bottleneck_params(w1, bn1, w2, bn2, w3, bn3):
    """Fold inference-mode BN into conv weights (host-side).

    w1:(Cmid,Cin,1,1), w2:(Cmid,Cmid,3,3), w3:(Cout,Cmid,1,1) in OIHW;
    bn* = (gamma, beta, running_mean, running_var).

    Returns bf16 matmul weights (Cmid zero-padded to a multiple of 8 so the
    in-kernel 9-tap stack is sublane aligned) and f32 (C, 1) biases:
      w1m:(Cp,Cin)  b1:(Cp,1)   w2m:(Cp,9*Cp) [co,(kh*3+kw)*Cp+ci]  b2:(Cp,1)
      w3m:(Cout,Cp) b3:(Cout,1)
    """
    def scale_bias(bn):
        gamma, beta, mean, var = bn
        s = gamma / jnp.sqrt(var + BN_EPS)
        return s, beta - mean * s

    s1, c1 = scale_bias(bn1)
    s2, c2 = scale_bias(bn2)
    s3, c3 = scale_bias(bn3)

    Cmid, Cin = w1.shape[0], w1.shape[1]
    Cout = w3.shape[0]
    Cp = _round_up(Cmid, 8)
    pad = Cp - Cmid

    w1m = jnp.pad(w1.reshape(Cmid, Cin) * s1[:, None], ((0, pad), (0, 0)))
    b1 = jnp.pad(c1, (0, pad)).reshape(Cp, 1)

    w2s = jnp.pad(w2 * s2[:, None, None, None],
                  ((0, pad), (0, pad), (0, 0), (0, 0)))          # (Cp, Cp, 3, 3)
    # (co, ci, kh, kw) -> (co, kh, kw, ci) -> (Cp, 9*Cp); matches the in-kernel
    # tap order t = kh*3 + kw of the stacked patches.
    w2m = w2s.transpose(0, 2, 3, 1).reshape(Cp, 9 * Cp)
    b2 = jnp.pad(c2, (0, pad)).reshape(Cp, 1)

    w3m = jnp.pad(w3.reshape(Cout, Cmid) * s3[:, None], ((0, 0), (0, pad)))
    b3 = c3.reshape(Cout, 1)

    return (w1m.astype(jnp.bfloat16), b1.astype(jnp.float32),
            w2m.astype(jnp.bfloat16), b2.astype(jnp.float32),
            w3m.astype(jnp.bfloat16), b3.astype(jnp.float32))


def conv2_border_masks(H, W, HWp, images_per_step):
    """(9, 1, images_per_step*HWp) f32: 1 where tap (kh, kw) stays inside its image.

    Each image owns a contiguous HWp-lane slot; lane padding (>= H*W) and taps
    outside the HxW image are zeroed, so the in-kernel cyclic rolls never leak
    data across image or block boundaries.
    """
    hh, ww = jnp.meshgrid(jnp.arange(H), jnp.arange(W), indexing="ij")
    hh, ww = hh.reshape(-1), ww.reshape(-1)
    masks = []
    for kh in range(3):
        for kw in range(3):
            dh, dw = kh - 1, kw - 1
            ok = ((hh + dh >= 0) & (hh + dh < H) &
                  (ww + dw >= 0) & (ww + dw < W)).astype(jnp.float32)
            masks.append(jnp.pad(ok, (0, HWp - H * W)))
    m = jnp.stack(masks).reshape(9, 1, HWp)
    return jnp.tile(m, (1, 1, images_per_step))


def _reference(x, w1, bn1, w2, bn2, w3, bn3):
    """Faithful NCHW forward of the PyTorch module (inference-mode BN)."""
    def bn(y, p):
        gamma, beta, mean, var = (a[None, :, None, None] for a in p)
        return gamma * (y - mean) / jnp.sqrt(var + BN_EPS) + beta

    def conv(y, w, pad):
        return lax.conv_general_dilated(
            y, w, window_strides=(1, 1), padding=pad,
            dimension_numbers=("NCHW", "OIHW", "NCHW"),
            precision=lax.Precision.HIGHEST)

    out = jax.nn.relu(bn(conv(x, w1, "VALID"), bn1))
    out = jax.nn.relu(bn(conv(out, w2, [(1, 1), (1, 1)]), bn2))
    out = bn(conv(out, w3, "VALID"), bn3)
    return out + x                                  # no_relu=True


if __name__ == "__main__":
    # BottleNeck(in_channels=8, out_channels=4): EXPANSION=2 -> conv3 emits 8
    # channels, stride=1, downsample=None, no_relu=True (identity residual).
    N, H, W = 2, 16, 16
    Cin, Cmid = 8, 4
    Cout = Cmid * 2            # == Cin

    key = jax.random.PRNGKey(0)
    ks = jax.random.split(key, 7)

    x = jax.random.normal(ks[0], (N, Cin, H, W), jnp.float32)

    w1 = 0.1 * jax.random.normal(ks[1], (Cmid, Cin, 1, 1), jnp.float32)
    w2 = 0.1 * jax.random.normal(ks[2], (Cmid, Cmid, 3, 3), jnp.float32)
    w3 = 0.1 * jax.random.normal(ks[3], (Cout, Cmid, 1, 1), jnp.float32)

    def make_bn(k, c):
        kg, kb, km, kv = jax.random.split(k, 4)
        gamma = 1.0 + 0.1 * jax.random.normal(kg, (c,), jnp.float32)
        beta = 0.1 * jax.random.normal(kb, (c,), jnp.float32)
        mean = 0.1 * jax.random.normal(km, (c,), jnp.float32)
        var = jnp.abs(jax.random.normal(kv, (c,), jnp.float32)) + 0.5
        return gamma, beta, mean, var

    bn1 = make_bn(ks[4], Cmid)
    bn2 = make_bn(ks[5], Cmid)
    bn3 = make_bn(ks[6], Cout)

    folded = fold_bottleneck_params(w1, bn1, w2, bn2, w3, bn3)

    out = jax.block_until_ready(bottleneck_forward(x, folded))

    ref = _reference(x, w1, bn1, w2, bn2, w3, bn3)
    assert out.shape == (N, Cout, H, W)
    err = float(jnp.max(jnp.abs(out - ref)))
    # 1e-2 tolerates bf16 MXU operands (f32 accumulation) vs. the f32/HIGHEST
    # reference, while remaining ~2 orders of magnitude below any structural
    # or layout error.
    assert jnp.allclose(out, ref, atol=1e-2, rtol=1e-2), f"max abs err {err}"

    print("KERNEL_OK")
</pallas_src>

<mosaic_0001>
module attributes {stable_mosaic.version = 11 : i64} {
  func.func @_bottleneck_kernel(%arg0: i32, %arg1: memref<8x256xf32, #tpu.memory_space<vmem>>, %arg2: memref<8x8xbf16, #tpu.memory_space<vmem>>, %arg3: memref<8x1xf32, #tpu.memory_space<vmem>>, %arg4: memref<8x72xbf16, #tpu.memory_space<vmem>>, %arg5: memref<8x1xf32, #tpu.memory_space<vmem>>, %arg6: memref<8x8xbf16, #tpu.memory_space<vmem>>, %arg7: memref<8x1xf32, #tpu.memory_space<vmem>>, %arg8: memref<9x1x256xf32, #tpu.memory_space<vmem>>, %arg9: memref<8x256xf32, #tpu.memory_space<vmem>>) attributes {dimension_semantics = [#tpu.dimension_semantics<parallel>], iteration_bounds = array<i64: 2>, scalar_prefetch = 0 : i64, scratch_operands = 0 : i64, tpu.core_type = #tpu.core_type<tc>, window_params = [{transform_indices = @transform_0, window_bounds = array<i64: 8, 256>}, {pipeline_mode = #tpu.pipeline_mode<synchronous>, transform_indices = @transform_1, window_bounds = array<i64: 8, 8>}, {pipeline_mode = #tpu.pipeline_mode<synchronous>, transform_indices = @transform_2, window_bounds = array<i64: 8, 1>}, {pipeline_mode = #tpu.pipeline_mode<synchronous>, transform_indices = @transform_3, window_bounds = array<i64: 8, 72>}, {pipeline_mode = #tpu.pipeline_mode<synchronous>, transform_indices = @transform_4, window_bounds = array<i64: 8, 1>}, {pipeline_mode = #tpu.pipeline_mode<synchronous>, transform_indices = @transform_5, window_bounds = array<i64: 8, 8>}, {pipeline_mode = #tpu.pipeline_mode<synchronous>, transform_indices = @transform_6, window_bounds = array<i64: 8, 1>}, {pipeline_mode = #tpu.pipeline_mode<synchronous>, transform_indices = @transform_7, window_bounds = array<i64: 9, 1, 256>}, {transform_indices = @transform_8, window_bounds = array<i64: 8, 256>}]} {
    %c0 = arith.constant 0 : index
    %c0_0 = arith.constant 0 : index
    %0 = vector.load %arg1[%c0, %c0_0] : memref<8x256xf32, #tpu.memory_space<vmem>>, vector<8x256xf32>
    %c0_1 = arith.constant 0 : index
    %c0_2 = arith.constant 0 : index
    %1 = vector.load %arg2[%c0_1, %c0_2] : memref<8x8xbf16, #tpu.memory_space<vmem>>, vector<8x8xbf16>
    %2 = arith.truncf %0 : vector<8x256xf32> to vector<8x256xbf16>
    %cst = arith.constant dense<0.000000e+00> : vector<8x256xf32>
    %3 = tpu.matmul %1, %2, %cst {dimension_numbers = #tpu.dot_dimension_numbers<[1], [0], [0], [1], [0, 0, 1, 1], [], []>} : vector<8x8xbf16>, vector<8x256xbf16>, vector<8x256xf32> -> vector<8x256xf32>
    %c0_3 = arith.constant 0 : index
    %c0_4 = arith.constant 0 : index
    %4 = vector.load %arg3[%c0_3, %c0_4] : memref<8x1xf32, #tpu.memory_space<vmem>>, vector<8x1xf32>
    %5 = vector.broadcast %4 : vector<8x1xf32> to vector<8x256xf32>
    %6 = arith.addf %3, %5 : vector<8x256xf32>
    %cst_5 = arith.constant 0.000000e+00 : f32
    %7 = vector.broadcast %cst_5 : f32 to vector<8x256xf32>
    %8 = arith.maximumf %6, %7 : vector<8x256xf32>
    %c17_i32 = arith.constant 17 : i32
    %9 = tpu.dynamic_rotate %8 by %c17_i32 dim 1 : vector<8x256xf32>, i32 -> vector<8x256xf32>
    %c0_6 = arith.constant 0 : index
    %c0_7 = arith.constant 0 : index
    %c0_8 = arith.constant 0 : index
    %10 = vector.load %arg8[%c0_6, %c0_7, %c0_8] : memref<9x1x256xf32, #tpu.memory_space<vmem>>, vector<1x1x256xf32>
    %11 = vector.shape_cast %10 : vector<1x1x256xf32> to vector<1x256xf32>
    %12 = vector.broadcast %11 : vector<1x256xf32> to vector<8x256xf32>
    %13 = arith.mulf %9, %12 : vector<8x256xf32>
    %c16_i32 = arith.constant 16 : i32
    %14 = tpu.dynamic_rotate %8 by %c16_i32 dim 1 : vector<8x256xf32>, i32 -> vector<8x256xf32>
    %c1 = arith.constant 1 : index
    %c0_9 = arith.constant 0 : index
    %c0_10 = arith.constant 0 : index
    %15 = vector.load %arg8[%c1, %c0_9, %c0_10] : memref<9x1x256xf32, #tpu.memory_space<vmem>>, vector<1x1x256xf32>
    %16 = vector.shape_cast %15 : vector<1x1x256xf32> to vector<1x256xf32>
    %17 = vector.broadcast %16 : vector<1x256xf32> to vector<8x256xf32>
    %18 = arith.mulf %14, %17 : vector<8x256xf32>
    %c15_i32 = arith.constant 15 : i32
    %19 = tpu.dynamic_rotate %8 by %c15_i32 dim 1 : vector<8x256xf32>, i32 -> vector<8x256xf32>
    %c2 = arith.constant 2 : index
    %c0_11 = arith.constant 0 : index
    %c0_12 = arith.constant 0 : index
    %20 = vector.load %arg8[%c2, %c0_11, %c0_12] : memref<9x1x256xf32, #tpu.memory_space<vmem>>, vector<1x1x256xf32>
    %21 = vector.shape_cast %20 : vector<1x1x256xf32> to vector<1x256xf32>
    %22 = vector.broadcast %21 : vector<1x256xf32> to vector<8x256xf32>
    %23 = arith.mulf %19, %22 : vector<8x256xf32>
    %c1_i32 = arith.constant 1 : i32
    %24 = tpu.dynamic_rotate %8 by %c1_i32 dim 1 : vector<8x256xf32>, i32 -> vector<8x256xf32>
    %c3 = arith.constant 3 : index
    %c0_13 = arith.constant 0 : index
    %c0_14 = arith.constant 0 : index
    %25 = vector.load %arg8[%c3, %c0_13, %c0_14] : memref<9x1x256xf32, #tpu.memory_space<vmem>>, vector<1x1x256xf32>
    %26 = vector.shape_cast %25 : vector<1x1x256xf32> to vector<1x256xf32>
    %27 = vector.broadcast %26 : vector<1x256xf32> to vector<8x256xf32>
    %28 = arith.mulf %24, %27 : vector<8x256xf32>
    %c255_i32 = arith.constant 255 : i32
    %29 = tpu.dynamic_rotate %8 by %c255_i32 dim 1 : vector<8x256xf32>, i32 -> vector<8x256xf32>
    %c5 = arith.constant 5 : index
    %c0_15 = arith.constant 0 : index
    %c0_16 = arith.constant 0 : index
    %30 = vector.load %arg8[%c5, %c0_15, %c0_16] : memref<9x1x256xf32, #tpu.memory_space<vmem>>, vector<1x1x256xf32>
    %31 = vector.shape_cast %30 : vector<1x1x256xf32> to vector<1x256xf32>
    %32 = vector.broadcast %31 : vector<1x256xf32> to vector<8x256xf32>
    %33 = arith.mulf %29, %32 : vector<8x256xf32>
    %c241_i32 = arith.constant 241 : i32
    %34 = tpu.dynamic_rotate %8 by %c241_i32 dim 1 : vector<8x256xf32>, i32 -> vector<8x256xf32>
    %c6 = arith.constant 6 : index
    %c0_17 = arith.constant 0 : index
    %c0_18 = arith.constant 0 : index
    %35 = vector.load %arg8[%c6, %c0_17, %c0_18] : memref<9x1x256xf32, #tpu.memory_space<vmem>>, vector<1x1x256xf32>
    %36 = vector.shape_cast %35 : vector<1x1x256xf32> to vector<1x256xf32>
    %37 = vector.broadcast %36 : vector<1x256xf32> to vector<8x256xf32>
    %38 = arith.mulf %34, %37 : vector<8x256xf32>
    %c240_i32 = arith.constant 240 : i32
    %39 = tpu.dynamic_rotate %8 by %c240_i32 dim 1 : vector<8x256xf32>, i32 -> vector<8x256xf32>
    %c7 = arith.constant 7 : index
    %c0_19 = arith.constant 0 : index
    %c0_20 = arith.constant 0 : index
    %40 = vector.load %arg8[%c7, %c0_19, %c0_20] : memref<9x1x256xf32, #tpu.memory_space<vmem>>, vector<1x1x256xf32>
    %41 = vector.shape_cast %40 : vector<1x1x256xf32> to vector<1x256xf32>
    %42 = vector.broadcast %41 : vector<1x256xf32> to vector<8x256xf32>
    %43 = arith.mulf %39, %42 : vector<8x256xf32>
    %c239_i32 = arith.constant 239 : i32
    %44 = tpu.dynamic_rotate %8 by %c239_i32 dim 1 : vector<8x256xf32>, i32 -> vector<8x256xf32>
    %c8 = arith.constant 8 : index
    %c0_21 = arith.constant 0 : index
    %c0_22 = arith.constant 0 : index
    %45 = vector.load %arg8[%c8, %c0_21, %c0_22] : memref<9x1x256xf32, #tpu.memory_space<vmem>>, vector<1x1x256xf32>
    %46 = vector.shape_cast %45 : vector<1x1x256xf32> to vector<1x256xf32>
    %47 = vector.broadcast %46 : vector<1x256xf32> to vector<8x256xf32>
    %48 = arith.mulf %44, %47 : vector<8x256xf32>
    %49 = tpu.concatenate %13, %18, %23, %28, %8, %33, %38, %43, %48 in 0 : vector<8x256xf32>, vector<8x256xf32>, vector<8x256xf32>, vector<8x256xf32>, vector<8x256xf32>, vector<8x256xf32>, vector<8x256xf32>, vector<8x256xf32>, vector<8x256xf32> -> vector<72x256xf32>
    %c0_23 = arith.constant 0 : index
    %c0_24 = arith.constant 0 : index
    %50 = vector.load %arg4[%c0_23, %c0_24] : memref<8x72xbf16, #tpu.memory_space<vmem>>, vector<8x72xbf16>
    %51 = arith.truncf %49 : vector<72x256xf32> to vector<72x256xbf16>
    %cst_25 = arith.constant dense<0.000000e+00> : vector<8x256xf32>
    %52 = tpu.matmul %50, %51, %cst_25 {dimension_numbers = #tpu.dot_dimension_numbers<[1], [0], [0], [1], [0, 0, 1, 1], [], []>} : vector<8x72xbf16>, vector<72x256xbf16>, vector<8x256xf32> -> vector<8x256xf32>
    %c0_26 = arith.constant 0 : index
    %c0_27 = arith.constant 0 : index
    %53 = vector.load %arg5[%c0_26, %c0_27] : memref<8x1xf32, #tpu.memory_space<vmem>>, vector<8x1xf32>
    %54 = vector.broadcast %53 : vector<8x1xf32> to vector<8x256xf32>
    %55 = arith.addf %52, %54 : vector<8x256xf32>
    %cst_28 = arith.constant 0.000000e+00 : f32
    %56 = vector.broadcast %cst_28 : f32 to vector<8x256xf32>
    %57 = arith.maximumf %55, %56 : vector<8x256xf32>
    %c0_29 = arith.constant 0 : index
    %c0_30 = arith.constant 0 : index
    %58 = vector.load %arg6[%c0_29, %c0_30] : memref<8x8xbf16, #tpu.memory_space<vmem>>, vector<8x8xbf16>
    %59 = arith.truncf %57 : vector<8x256xf32> to vector<8x256xbf16>
    %cst_31 = arith.constant dense<0.000000e+00> : vector<8x256xf32>
    %60 = tpu.matmul %58, %59, %cst_31 {dimension_numbers = #tpu.dot_dimension_numbers<[1], [0], [0], [1], [0, 0, 1, 1], [], []>} : vector<8x8xbf16>, vector<8x256xbf16>, vector<8x256xf32> -> vector<8x256xf32>
    %c0_32 = arith.constant 0 : index
    %c0_33 = arith.constant 0 : index
    %61 = vector.load %arg7[%c0_32, %c0_33] : memref<8x1xf32, #tpu.memory_space<vmem>>, vector<8x1xf32>
    %62 = vector.broadcast %61 : vector<8x1xf32> to vector<8x256xf32>
    %63 = arith.addf %60, %62 : vector<8x256xf32>
    %64 = arith.addf %63, %0 : vector<8x256xf32>
    %c0_34 = arith.constant 0 : index
    %c0_35 = arith.constant 0 : index
    %65 = vector.load %arg9[%c0_34, %c0_35] : memref<8x256xf32, #tpu.memory_space<vmem>>, vector<8x256xf32>
    tpu.vector_store %arg9[%c0_34, %c0_35], %64 {strides = array<i32>} : memref<8x256xf32, #tpu.memory_space<vmem>>, vector<8x256xf32>,
    return
  }
  func.func @transform_0(%arg0: i32) -> (i32, i32) {
    %c0_i32 = arith.constant 0 : i32
    %c0_i32_0 = arith.constant 0 : i32
    return %c0_i32, %arg0 : i32, i32
  }
  func.func @transform_1(%arg0: i32) -> (i32, i32) {
    %c0_i32 = arith.constant 0 : i32
    %c0_i32_0 = arith.constant 0 : i32
    %c0_i32_1 = arith.constant 0 : i32
    return %c0_i32, %c0_i32_0 : i32, i32
  }
  func.func @transform_2(%arg0: i32) -> (i32, i32) {
    %c0_i32 = arith.constant 0 : i32
    %c0_i32_0 = arith.constant 0 : i32
    %c0_i32_1 = arith.constant 0 : i32
    return %c0_i32, %c0_i32_0 : i32, i32
  }
  func.func @transform_3(%arg0: i32) -> (i32, i32) {
    %c0_i32 = arith.constant 0 : i32
    %c0_i32_0 = arith.constant 0 : i32
    %c0_i32_1 = arith.constant 0 : i32
    return %c0_i32, %c0_i32_0 : i32, i32
  }
  func.func @transform_4(%arg0: i32) -> (i32, i32) {
    %c0_i32 = arith.constant 0 : i32
    %c0_i32_0 = arith.constant 0 : i32
    %c0_i32_1 = arith.constant 0 : i32
    return %c0_i32, %c0_i32_0 : i32, i32
  }
  func.func @transform_5(%arg0: i32) -> (i32, i32) {
    %c0_i32 = arith.constant 0 : i32
    %c0_i32_0 = arith.constant 0 : i32
    %c0_i32_1 = arith.constant 0 : i32
    return %c0_i32, %c0_i32_0 : i32, i32
  }
  func.func @transform_6(%arg0: i32) -> (i32, i32) {
    %c0_i32 = arith.constant 0 : i32
    %c0_i32_0 = arith.constant 0 : i32
    %c0_i32_1 = arith.constant 0 : i32
    return %c0_i32, %c0_i32_0 : i32, i32
  }
  func.func @transform_7(%arg0: i32) -> (i32, i32, i32) {
    %c0_i32 = arith.constant 0 : i32
    %c0_i32_0 = arith.constant 0 : i32
    %c0_i32_1 = arith.constant 0 : i32
    %c0_i32_2 = arith.constant 0 : i32
    return %c0_i32, %c0_i32_0, %c0_i32_1 : i32, i32, i32
  }
  func.func @transform_8(%arg0: i32) -> (i32, i32) {
    %c0_i32 = arith.constant 0 : i32
    %c0_i32_0 = arith.constant 0 : i32
    return %c0_i32, %arg0 : i32, i32
  }
}

</mosaic_0001>

<llo_original>
// kernel: tpu_custom_call.1
$region0: #{tpu_custom_call.1}
  #allocation0 [shape = 'u32[]', space=smem, size = 0x4, offset = 0x4, fixed_abs, tag = 'smem constant byte address 0x4 - core index']
  #allocation1 [shape = 'u32[144,128]{1,0:T(1,128)}', space=vmem, size = 0x12000, scoped, tag = 'internal scratch']
  %s0 = inlined_call_operand.hbm [shape: f32[8,512], index: 0, kind: input, shape index: {}]
  %s1 = inlined_call_operand.vmem [shape: bf16[8,8], index: 1, kind: input, shape index: {}]
  %s2 = inlined_call_operand.vmem [shape: f32[8,1], index: 2, kind: input, shape index: {}]
  %s3 = inlined_call_operand.vmem [shape: bf16[8,72], index: 3, kind: input, shape index: {}]
  %s4 = inlined_call_operand.vmem [shape: f32[8,1], index: 4, kind: input, shape index: {}]
  %s5 = inlined_call_operand.vmem [shape: bf16[8,8], index: 5, kind: input, shape index: {}]
  %s6 = inlined_call_operand.vmem [shape: f32[8,1], index: 6, kind: input, shape index: {}]
  %s7 = inlined_call_operand.vmem [shape: f32[9,1,256], index: 7, kind: input, shape index: {}]
  %s8 = inlined_call_operand.hbm [shape: f32[8,512], index: 8, kind: output, shape index: {}]
  %s9 = sld [smem:[#allocation0]]
  $region69: #{tpu_custom_call.1} parent=0
    _
  %s11 = ssub.s32 1, %s9
  %s12 = scalar_select 0, %s11, %s9
  $region1: #{tpu_custom_call.1} parent=0
    #allocation2 [shape = 'u8[16384]{0}', space=vmem, size = 0x4000, scoped, tag = 'input window, operand 0']
    #allocation3 [shape = 's32[2]{0}', space=sflag, size = 0x8, scoped, tag = 'scoped memory for tpu_custom_call.1']
    #allocation4 [shape = 's32[2]{0}', space=sflag, size = 0x8, scoped, tag = 'scoped memory for tpu_custom_call.1']
    #allocation5 [shape = 'u8[16384]{0}', space=vmem, size = 0x4000, scoped, tag = 'output window, operand 0']
    %13 = vsyncpa [#allocation3], 0
    %s14 = scalar_lea.sflag [#allocation3], 1
    %15 = vsyncpa %s14, 0
    %16 = vsyncpa [#allocation4], 0
    %s17 = scalar_lea.sflag [#allocation4], 1
    %18 = vsyncpa %s17, 0
    loop: start=0, step=1, limit=4
    $region2: #{tpu_custom_call.1} parent=1 // loop_pre_header
      _
    $region3: #{tpu_custom_call.1} parent=1 // loop_header
      %s20 = sphi 0, %s24
      %p21 = scmp.ge.s32.totalorder %s20, 4
      %s30 = sphi 0, %s32
      %s33 = sphi 0, %s30
      %s34 = sphi 0, %s33
      %s50 = sphi 0, %s34
      %s54 = sphi 0, %s54
      %s56 = sphi 0, %s54
      %s57 = sphi 0, %s56
      %s71 = sphi 0, %s57
      %s75 = sphi 0, %s75
      %s77 = sphi 0, %s75
      %s78 = sphi 0, %s77
      %s92 = sphi 0, %s78
      %s96 = sphi 0, %s96
      %s98 = sphi 0, %s96
      %s99 = sphi 0, %s98
      %s113 = sphi 0, %s99
      %s117 = sphi 0, %s117
      %s119 = sphi 0, %s117
      %s120 = sphi 0, %s119
      %s134 = sphi 0, %s120
      %s138 = sphi 0, %s138
      %s140 = sphi 0, %s138
      %s141 = sphi 0, %s140
      %s155 = sphi 0, %s141
      %s159 = sphi 0, %s159
      %s161 = sphi 0, %s159
      %s162 = sphi 0, %s161
      %s176 = sphi 0, %s162
      %s180 = sphi 0, %s180
      %s182 = sphi 0, %s180
      %s183 = sphi 0, %s182
      %s197 = sphi 0, %s183
      %s203 = sphi 0, %s205
      %s206 = sphi 0, %s203
      %s207 = sphi 0, %s206
      %s223 = sphi 0, %s207
    $region4: #{tpu_custom_call.1} parent=1 // loop_header_branch
      %23 = sbr.rel (%p21) target = $region8
    $region5: #{tpu_custom_call.1} parent=1 // loop_body
      %s25 = ssub.s32 %s20, 1
      %s26 = ssub.s32 %s20, 2
      %s27 = sadd.s32 %s20, 1
      %s28 = ssub.s32 %s20, %s27
      %p29 = scmp.eq.s32.totalorder %s28, 0
      %s31 = sadd.s32 %s30, 1
      %s32 = scalar_select %p29, %s30, %s31
      %p35 = pneg %p29
      %p36 = scmp.eq.s32.totalorder %s20, 1
      %p37 = por %p35, %p36
      %p38 = scmp.ne.s32.totalorder %s30, %s33
      %p39 = scmp.eq.s32.totalorder %s20, 0
      %p40 = por %p38, %p39
      %p41 = scmp.ne.s32.totalorder %s30, %s33
      %p42 = scmp.eq.s32.totalorder %s25, 1
      %p43 = por %p41, %p42
      %p44 = scmp.ne.s32.totalorder %s33, %s34
      %p45 = scmp.eq.s32.totalorder %s25, 0
      %p46 = por %p44, %p45
      %p47 = scmp.ne.s32.totalorder %s33, %s34
      %p48 = scmp.eq.s32.totalorder %s26, 1
      %p49 = por %p47, %p48
      %p51 = scmp.ne.s32.totalorder %s34, %s50
      %p52 = scmp.eq.s32.totalorder %s26, 0
      %p53 = por %p51, %p52
      %s55 = sadd.s32 %s54, 1
      %p58 = scmp.eq.s32.totalorder %s20, 1
      %p59 = scmp.ne.s32.totalorder %s54, %s56
      %p60 = scmp.eq.s32.totalorder %s20, 0
      %p61 = por %p59, %p60
      %p62 = scmp.ne.s32.totalorder %s54, %s56
      %p63 = scmp.eq.s32.totalorder %s25, 1
      %p64 = por %p62, %p63
      %p65 = scmp.ne.s32.totalorder %s56, %s57
      %p66 = scmp.eq.s32.totalorder %s25, 0
      %p67 = por %p65, %p66
      %p68 = scmp.ne.s32.totalorder %s56, %s57
      %p69 = scmp.eq.s32.totalorder %s26, 1
      %p70 = por %p68, %p69
      %p72 = scmp.ne.s32.totalorder %s57, %s71
      %p73 = scmp.eq.s32.totalorder %s26, 0
      %p74 = por %p72, %p73
      %s76 = sadd.s32 %s75, 1
      %p79 = scmp.eq.s32.totalorder %s20, 1
      %p80 = scmp.ne.s32.totalorder %s75, %s77
      %p81 = scmp.eq.s32.totalorder %s20, 0
      %p82 = por %p80, %p81
      %p83 = scmp.ne.s32.totalorder %s75, %s77
      %p84 = scmp.eq.s32.totalorder %s25, 1
      %p85 = por %p83, %p84
      %p86 = scmp.ne.s32.totalorder %s77, %s78
      %p87 = scmp.eq.s32.totalorder %s25, 0
      %p88 = por %p86, %p87
      %p89 = scmp.ne.s32.totalorder %s77, %s78
      %p90 = scmp.eq.s32.totalorder %s26, 1
      %p91 = por %p89, %p90
      %p93 = scmp.ne.s32.totalorder %s78, %s92
      %p94 = scmp.eq.s32.totalorder %s26, 0
      %p95 = por %p93, %p94
      %s97 = sadd.s32 %s96, 1
      %p100 = scmp.eq.s32.totalorder %s20, 1
      %p101 = scmp.ne.s32.totalorder %s96, %s98
      %p102 = scmp.eq.s32.totalorder %s20, 0
      %p103 = por %p101, %p102
      %p104 = scmp.ne.s32.totalorder %s96, %s98
      %p105 = scmp.eq.s32.totalorder %s25, 1
      %p106 = por %p104, %p105
      %p107 = scmp.ne.s32.totalorder %s98, %s99
      %p108 = scmp.eq.s32.totalorder %s25, 0
      %p109 = por %p107, %p108
      %p110 = scmp.ne.s32.totalorder %s98, %s99
      %p111 = scmp.eq.s32.totalorder %s26, 1
      %p112 = por %p110, %p111
      %p114 = scmp.ne.s32.totalorder %s99, %s113
      %p115 = scmp.eq.s32.totalorder %s26, 0
      %p116 = por %p114, %p115
      %s118 = sadd.s32 %s117, 1
      %p121 = scmp.eq.s32.totalorder %s20, 1
      %p122 = scmp.ne.s32.totalorder %s117, %s119
      %p123 = scmp.eq.s32.totalorder %s20, 0
      %p124 = por %p122, %p123
      %p125 = scmp.ne.s32.totalorder %s117, %s119
      %p126 = scmp.eq.s32.totalorder %s25, 1
      %p127 = por %p125, %p126
      %p128 = scmp.ne.s32.totalorder %s119, %s120
      %p129 = scmp.eq.s32.totalorder %s25, 0
      %p130 = por %p128, %p129
      %p131 = scmp.ne.s32.totalorder %s119, %s120
      %p132 = scmp.eq.s32.totalorder %s26, 1
      %p133 = por %p131, %p132
      %p135 = scmp.ne.s32.totalorder %s120, %s134
      %p136 = scmp.eq.s32.totalorder %s26, 0
      %p137 = por %p135, %p136
      %s139 = sadd.s32 %s138, 1
      %p142 = scmp.eq.s32.totalorder %s20, 1
      %p143 = scmp.ne.s32.totalorder %s138, %s140
      %p144 = scmp.eq.s32.totalorder %s20, 0
      %p145 = por %p143, %p144
      %p146 = scmp.ne.s32.totalorder %s138, %s140
      %p147 = scmp.eq.s32.totalorder %s25, 1
      %p148 = por %p146, %p147
      %p149 = scmp.ne.s32.totalorder %s140, %s141
      %p150 = scmp.eq.s32.totalorder %s25, 0
      %p151 = por %p149, %p150
      %p152 = scmp.ne.s32.totalorder %s140, %s141
      %p153 = scmp.eq.s32.totalorder %s26, 1
      %p154 = por %p152, %p153
      %p156 = scmp.ne.s32.totalorder %s141, %s155
      %p157 = scmp.eq.s32.totalorder %s26, 0
      %p158 = por %p156, %p157
      %s160 = sadd.s32 %s159, 1
      %p163 = scmp.eq.s32.totalorder %s20, 1
      %p164 = scmp.ne.s32.totalorder %s159, %s161
      %p165 = scmp.eq.s32.totalorder %s20, 0
      %p166 = por %p164, %p165
      %p167 = scmp.ne.s32.totalorder %s159, %s161
      %p168 = scmp.eq.s32.totalorder %s25, 1
      %p169 = por %p167, %p168
      %p170 = scmp.ne.s32.totalorder %s161, %s162
      %p171 = scmp.eq.s32.totalorder %s25, 0
      %p172 = por %p170, %p171
      %p173 = scmp.ne.s32.totalorder %s161, %s162
      %p174 = scmp.eq.s32.totalorder %s26, 1
      %p175 = por %p173, %p174
      %p177 = scmp.ne.s32.totalorder %s162, %s176
      %p178 = scmp.eq.s32.totalorder %s26, 0
      %p179 = por %p177, %p178
      %s181 = sadd.s32 %s180, 1
      %p184 = scmp.eq.s32.totalorder %s20, 1
      %p185 = scmp.ne.s32.totalorder %s180, %s182
      %p186 = scmp.eq.s32.totalorder %s20, 0
      %p187 = por %p185, %p186
      %p188 = scmp.ne.s32.totalorder %s180, %s182
      %p189 = scmp.eq.s32.totalorder %s25, 1
      %p190 = por %p188, %p189
      %p191 = scmp.ne.s32.totalorder %s182, %s183
      %p192 = scmp.eq.s32.totalorder %s25, 0
      %p193 = por %p191, %p192
      %p194 = scmp.ne.s32.totalorder %s182, %s183
      %p195 = scmp.eq.s32.totalorder %s26, 1
      %p196 = por %p194, %p195
      %p198 = scmp.ne.s32.totalorder %s183, %s197
      %p199 = scmp.eq.s32.totalorder %s26, 0
      %p200 = por %p198, %p199
      %s201 = ssub.s32 %s20, %s27
      %p202 = scmp.eq.s32.totalorder %s201, 0
      %s204 = sadd.s32 %s203, 1
      %s205 = scalar_select %p202, %s203, %s204
      %p208 = pneg %p202
      %p209 = scmp.eq.s32.totalorder %s20, 1
      %p210 = por %p208, %p209
      %p211 = scmp.ne.s32.totalorder %s203, %s206
      %p212 = scmp.eq.s32.totalorder %s20, 0
      %p213 = por %p211, %p212
      %p214 = scmp.ne.s32.totalorder %s203, %s206
      %p215 = scmp.eq.s32.totalorder %s25, 1
      %p216 = por %p214, %p215
      %p217 = scmp.ne.s32.totalorder %s206, %s207
      %p218 = scmp.eq.s32.totalorder %s25, 0
      %p219 = por %p217, %p218
      %p220 = scmp.ne.s32.totalorder %s206, %s207
      %p221 = scmp.eq.s32.totalorder %s26, 1
      %p222 = por %p220, %p221
      %p224 = scmp.ne.s32.totalorder %s207, %s223
      %p225 = scmp.eq.s32.totalorder %s26, 0
      %p226 = por %p224, %p225
      %p227 = scmp.le.s32.totalorder 1, %s20
      %p228 = scmp.lt.s32.totalorder %s20, 3
      %p229 = pnand %p227, %p228
      %p230 = pneg %p229
      // Predicated region
      $region9: #{tpu_custom_call.1} parent=5 // pred_check
        _
      $region10: #{tpu_custom_call.1} parent=5 // pred_check_branch
        %232 = sbr.rel (%p229) target = $region12
      $region11: #{tpu_custom_call.1} parent=5 // pred_region
        %s233 = ssub.s32 %s20, 1
        // Predicated region
        $region13: #{tpu_custom_call.1} parent=11 // pred_check
          %p234 = pneg %p67
        $region14: #{tpu_custom_call.1} parent=11 // pred_check_branch
          %236 = sbr.rel (%p234) target = $region16
        $region15: #{tpu_custom_call.1} parent=11 // pred_region
          _
        $region16: #{tpu_custom_call.1} parent=11 // pred_fallthru
          _
        // Predicated region
        $region17: #{tpu_custom_call.1} parent=11 // pred_check
          %p237 = pneg %p88
        $region18: #{tpu_custom_call.1} parent=11 // pred_check_branch
          %239 = sbr.rel (%p237) target = $region20
        $region19: #{tpu_custom_call.1} parent=11 // pred_region
          _
        $region20: #{tpu_custom_call.1} parent=11 // pred_fallthru
          _
        // Predicated region
        $region21: #{tpu_custom_call.1} parent=11 // pred_check
          %p240 = pneg %p109
        $region22: #{tpu_custom_call.1} parent=11 // pred_check_branch
          %242 = sbr.rel (%p240) target = $region24
        $region23: #{tpu_custom_call.1} parent=11 // pred_region
          _
        $region24: #{tpu_custom_call.1} parent=11 // pred_fallthru
          _
        // Predicated region
        $region25: #{tpu_custom_call.1} parent=11 // pred_check
          %p243 = pneg %p130
        $region26: #{tpu_custom_call.1} parent=11 // pred_check_branch
          %245 = sbr.rel (%p243) target = $region28
        $region27: #{tpu_custom_call.1} parent=11 // pred_region
          _
        $region28: #{tpu_custom_call.1} parent=11 // pred_fallthru
          _
        // Predicated region
        $region29: #{tpu_custom_call.1} parent=11 // pred_check
          %p246 = pneg %p151
        $region30: #{tpu_custom_call.1} parent=11 // pred_check_branch
          %248 = sbr.rel (%p246) target = $region32
        $region31: #{tpu_custom_call.1} parent=11 // pred_region
          _
        $region32: #{tpu_custom_call.1} parent=11 // pred_fallthru
          _
        // Predicated region
        $region33: #{tpu_custom_call.1} parent=11 // pred_check
          %p249 = pneg %p172
        $region34: #{tpu_custom_call.1} parent=11 // pred_check_branch
          %251 = sbr.rel (%p249) target = $region36
        $region35: #{tpu_custom_call.1} parent=11 // pred_region
          _
        $region36: #{tpu_custom_call.1} parent=11 // pred_fallthru
          _
        // Predicated region
        $region37: #{tpu_custom_call.1} parent=11 // pred_check
          %p252 = pneg %p193
        $region38: #{tpu_custom_call.1} parent=11 // pred_check_branch
          %254 = sbr.rel (%p252) target = $region40
        $region39: #{tpu_custom_call.1} parent=11 // pred_region
          _
        $region40: #{tpu_custom_call.1} parent=11 // pred_fallthru
          _
      $region12: #{tpu_custom_call.1} parent=5 // pred_fallthru
        _
      %p255 = scmp.lt.s32.totalorder %s20, 2
      // Predicated region
      $region41: #{tpu_custom_call.1} parent=5 // pred_check
        %p256 = pneg %p255
      $region42: #{tpu_custom_call.1} parent=5 // pred_check_branch
        %258 = sbr.rel (%p256) target = $region44
      $region43: #{tpu_custom_call.1} parent=5 // pred_region
        // Predicated region
        $region45: #{tpu_custom_call.1} parent=43 // pred_check
          %p259 = pneg %p40
        $region46: #{tpu_custom_call.1} parent=43 // pred_check_branch
          %261 = sbr.rel (%p259) target = $region48
        $region47: #{tpu_custom_call.1} parent=43 // pred_region
          %s262 = sand.u32 %s30, 1
          %s263 = scalar_lea.sflag [#allocation3], %s262
          %s264 = sand.u32 %s30, 1
          %s265 = smul.addr %s264, 16
          %s266 = scalar_lea.vmem [#allocation2], %s265
          %s267 = smul.u32 2, %s20
          %s269 = ssub.s32 256, 256
          %270 = vsyncadd %s263, %s269
          %s271 = smul.addr %s267, 128
          %s272 = scalar_lea.hbm %s0, %s271
          %s274 = sshll.u32 %s266, 4
          %s275 = int_to_ptr.vmem [resolvable:$true] %s274
          %277 = dma.hbm_to_vmem [thread:$0]  %s272, 256, %s275, %s263
        $region48: #{tpu_custom_call.1} parent=43 // pred_fallthru
          _
      $region44: #{tpu_custom_call.1} parent=5 // pred_fallthru
        _
      %p278 = scmp.le.s32.totalorder 1, %s20
      %p279 = scmp.lt.s32.totalorder %s20, 3
      %p280 = pnand %p278, %p279
      %p281 = pneg %p280
      // Predicated region
      $region49: #{tpu_custom_call.1} parent=5 // pred_check
        _
      $region50: #{tpu_custom_call.1} parent=5 // pred_check_branch
        %283 = sbr.rel (%p280) target = $region52
      $region51: #{tpu_custom_call.1} parent=5 // pred_region
        %s284 = ssub.s32 %s20, 1
        %s285 = sand.u32 %s33, 1
        %s286 = scalar_lea.sflag [#allocation3], %s285
        %s287 = sand.u32 %s33, 1
        %s288 = smul.addr %s287, 16
        %s289 = scalar_lea.vmem [#allocation2], %s288
        // Predicated region
        $region53: #{tpu_custom_call.1} parent=51 // pred_check
          %p290 = pneg %p46
        $region54: #{tpu_custom_call.1} parent=51 // pred_check_branch
          %292 = sbr.rel (%p290) target = $region56
        $region55: #{tpu_custom_call.1} parent=51 // pred_region
          %293 = dma.done %s286, 256
        $region56: #{tpu_custom_call.1} parent=51 // pred_fallthru
          _
        %s294 = sand.u32 %s33, 1
        %s295 = scalar_lea.sflag [#allocation3], %s294
        %s296 = sand.u32 %s33, 1
        %s297 = smul.addr %s296, 16
        %s298 = scalar_lea.vmem [#allocation2], %s297
        %p299 = pneg %p46
        %p300 = pneg %p43
        %p301 = pneg %p67
        %p302 = pneg %p64
        %p303 = pneg %p88
        %p304 = pneg %p85
        %p305 = pneg %p109
        %p306 = pneg %p106
        %p307 = pneg %p130
        %p308 = pneg %p127
        %p309 = pneg %p151
        %p310 = pneg %p148
        %p311 = pneg %p172
        %p312 = pneg %p169
        %p313 = pneg %p193
        %p314 = pneg %p190
        %p315 = pneg %p219
        %p316 = pneg %p216
        %s317 = sand.u32 %s206, 1
        %s318 = scalar_lea.sflag [#allocation4], %s317
        %s319 = sand.u32 %s206, 1
        %s320 = smul.addr %s319, 16
        %s321 = scalar_lea.vmem [#allocation5], %s320
        %s322 = smul.u32 2, %s25
        %s323 = smul.u32 2, %s25
        %v325 = vld [vmem:[%s289] sm:$0xff]
        %v326 = vld [vmem:[%s289 + $0x8] sm:$0xff]
        %v327 = vld [vmem:[%s1] sm:$0xf]
        %v328 = vpack.c.bf16 %v325, %v325
        %v329 = vpack.c.bf16 %v326, %v326
        %v330 = vld [vmem:[%s2] sm:$0xff]
        %332 = vset.pattern.permute.xlu0 0
        %333 = vperm.xlu0 %332, %v330
        %v334 = vpop.permute.xlu0 %333
        %vm336 = vcmask 64512
        %v338 = vsel %vm336, %v327, 0
        %vm340 = vcmask 1043456
        %v342 = vsel %vm340, %v328, 0
        %v345 = vsel %vm340, %v329, 0
        %347 = vmatprep.subr.bf16.mxu0 %v345
        %348 = vmatpush1.bf16.msra.mxu0 %v342
        %349 = vmatprep.subr.bf16.mxu0 0
        %350 = vmatpush1.bf16.msra.mxu0 0
        %351 = vmatprep.subr.bf16.mxu0 0
        %352 = vmatpush1.bf16.msra.mxu0 0
        %353 = vmatprep.subr.bf16.mxu0 0
        %354 = vmatpush1.bf16.msra.mxu0 0
        %355 = vmatprep.subr.bf16.mxu0 0
        %356 = vmatpush1.bf16.msra.mxu0 0
        %357 = vmatprep.subr.bf16.mxu0 0
        %358 = vmatpush1.bf16.msra.mxu0 0
        %359 = vmatprep.subr.bf16.mxu0 0
        %360 = vmatpush1.bf16.msra.mxu0 0
        %361 = vmatprep.subr.bf16.mxu0 0
        %362 = vmatpush1.bf16.msra.mxu0 0
        %363 = vmatprep.subr.bf16.mxu0 0
        %364 = vmatpush1.bf16.msra.mxu0 0
        %365 = vmatprep.subr.bf16.mxu0 0
        %366 = vmatpush1.bf16.msra.mxu0 0
        %367 = vmatprep.subr.bf16.mxu0 0
        %368 = vmatpush1.bf16.msra.mxu0 0
        %369 = vmatprep.subr.bf16.mxu0 0
        %370 = vmatpush1.bf16.msra.mxu0 0
        %371 = vmatprep.subr.bf16.mxu0 0
        %372 = vmatpush1.bf16.msra.mxu0 0
        %373 = vmatprep.subr.bf16.mxu0 0
        %374 = vmatpush1.bf16.msra.mxu0 0
        %375 = vmatprep.subr.bf16.mxu0 0
        %376 = vmatpush1.bf16.msra.mxu0 0
        %377 = vmatprep.subr.bf16.mxu0 0
        %378 = vmatpush1.bf16.msra.mxu0 0
        %379 = vmatprep.mubr.bf16.mxu0 0
        %380 = vmatmul.mubr.bf16.gmra.mrb[0].mxu0 %v338
        %v381 = vpop.f32.mrb[0].mxu0
        %v382 = vadd.f32 %v334, %v381
        %v383 = vpop.f32.mrb[0].mxu0
        %v384 = vadd.f32 %v334, %v383
        %v385 = vpop.f32.mrb[0].mxu0
        %v386 = vpop.f32.mrb[0].mxu0
        %387 = vdwg.mxu0
        %v388 = vmax.f32 %v382, 0.0
        %v389 = vmax.f32 %v384, 0.0
        %390 = vrot.lane.b32.xlu0 %v388, 17
        %v391 = vpop.permute.xlu0 %390
        %392 = vrot.lane.b32.xlu0 %v389, 17
        %v393 = vpop.permute.xlu0 %392
        %v394 = vlaneseq
        %v395 = vand.u32 %v394, 127
        %vm396 = vcmp.lt.s32.totalorder %v395, 17
        %v397 = vsel %vm396, %v391, %v393
        %v398 = vsel %vm396, %v393, %v391
        %v399 = vld [vmem:[%s7] sm:$0x3]
        %v401 = vlaneseq
        %v402 = vshrl.u32 %v401, 7
        %v403 = vsub.s32 0, %v402
        %v404 = vrot.slane %v399, %v403
        %v405 = vlaneseq
        %v406 = vshrl.u32 %v405, 7
        %v407 = vsub.s32 1, %v406
        %v408 = vrot.slane %v399, %v407
        %v411 = vmul.f32 %v398, %v404
        %v412 = vmul.f32 %v397, %v408
        %413 = vrot.lane.b32.xlu0 %v388, 16
        %v414 = vpop.permute.xlu0 %413
        %415 = vrot.lane.b32.xlu0 %v389, 16
        %v416 = vpop.permute.xlu0 %415
        %vm417 = vcmp.lt.s32.totalorder %v395, 16
        %v418 = vsel %vm417, %v414, %v416
        %v419 = vsel %vm417, %v416, %v414
        %s420 = scalar_lea.vmem %s7, 2
        %v421 = vld [vmem:[%s420] sm:$0x3]
        %v423 = vlaneseq
        %v424 = vshrl.u32 %v423, 7
        %v425 = vsub.s32 0, %v424
        %v426 = vrot.slane %v421, %v425
        %v427 = vlaneseq
        %v428 = vshrl.u32 %v427, 7
        %v429 = vsub.s32 1, %v428
        %v430 = vrot.slane %v421, %v429
        %v433 = vmul.f32 %v419, %v426
        %v434 = vmul.f32 %v418, %v430
        %435 = vrot.lane.b32.xlu0 %v388, 15
        %v436 = vpop.permute.xlu0 %435
        %437 = vrot.lane.b32.xlu0 %v389, 15
        %v438 = vpop.permute.xlu0 %437
        %vm439 = vcmp.lt.s32.totalorder %v395, 15
        %v440 = vsel %vm439, %v436, %v438
        %v441 = vsel %vm439, %v438, %v436
        %s442 = scalar_lea.vmem %s7, 4
        %v443 = vld [vmem:[%s442] sm:$0x3]
        %v445 = vlaneseq
        %v446 = vshrl.u32 %v445, 7
        %v447 = vsub.s32 0, %v446
        %v448 = vrot.slane %v443, %v447
        %v449 = vlaneseq
        %v450 = vshrl.u32 %v449, 7
        %v451 = vsub.s32 1, %v450
        %v452 = vrot.slane %v443, %v451
        %v455 = vmul.f32 %v441, %v448
        %v456 = vmul.f32 %v440, %v452
        %457 = vrot.lane.b32.xlu0 %v388, 1
        %v458 = vpop.permute.xlu0 %457
        %459 = vrot.lane.b32.xlu0 %v389, 1
        %v460 = vpop.permute.xlu0 %459
        %vm461 = vcmp.lt.s32.totalorder %v395, 1
        %v462 = vsel %vm461, %v458, %v460
        %v463 = vsel %vm461, %v460, %v458
        %s464 = scalar_lea.vmem %s7, 6
        %v465 = vld [vmem:[%s464] sm:$0x3]
        %v467 = vlaneseq
        %v468 = vshrl.u32 %v467, 7
        %v469 = vsub.s32 0, %v468
        %v470 = vrot.slane %v465, %v469
        %v471 = vlaneseq
        %v472 = vshrl.u32 %v471, 7
        %v473 = vsub.s32 1, %v472
        %v474 = vrot.slane %v465, %v473
        %v477 = vmul.f32 %v463, %v470
        %v478 = vmul.f32 %v462, %v474
        %479 = vrot.lane.b32.xlu0 %v388, 127
        %v480 = vpop.permute.xlu0 %479
        %481 = vrot.lane.b32.xlu0 %v389, 127
        %v482 = vpop.permute.xlu0 %481
        %vm483 = vcmp.lt.s32.totalorder %v395, 127
        %v484 = vsel %vm483, %v480, %v482
        %v485 = vsel %vm483, %v482, %v480
        %s486 = scalar_lea.vmem %s7, 10
        %v487 = vld [vmem:[%s486] sm:$0x3]
        %v489 = vlaneseq
        %v490 = vshrl.u32 %v489, 7
        %v491 = vsub.s32 0, %v490
        %v492 = vrot.slane %v487, %v491
        %v493 = vlaneseq
        %v494 = vshrl.u32 %v493, 7
        %v495 = vsub.s32 1, %v494
        %v496 = vrot.slane %v487, %v495
        %v499 = vmul.f32 %v484, %v492
        %v500 = vmul.f32 %v485, %v496
        %501 = vrot.lane.b32.xlu0 %v388, 113
        %v502 = vpop.permute.xlu0 %501
        %503 = vrot.lane.b32.xlu0 %v389, 113
        %v504 = vpop.permute.xlu0 %503
        %vm505 = vcmp.lt.s32.totalorder %v395, 113
        %v506 = vsel %vm505, %v502, %v504
        %v507 = vsel %vm505, %v504, %v502
        %s508 = scalar_lea.vmem %s7, 12
        %v509 = vld [vmem:[%s508] sm:$0x3]
        %v511 = vlaneseq
        %v512 = vshrl.u32 %v511, 7
        %v513 = vsub.s32 0, %v512
        %v514 = vrot.slane %v509, %v513
        %v515 = vlaneseq
        %v516 = vshrl.u32 %v515, 7
        %v517 = vsub.s32 1, %v516
        %v518 = vrot.slane %v509, %v517
        %v521 = vmul.f32 %v506, %v514
        %v522 = vmul.f32 %v507, %v518
        %523 = vrot.lane.b32.xlu0 %v388, 112
        %v524 = vpop.permute.xlu0 %523
        %525 = vrot.lane.b32.xlu0 %v389, 112
        %v526 = vpop.permute.xlu0 %525
        %vm527 = vcmp.lt.s32.totalorder %v395, 112
        %v528 = vsel %vm527, %v524, %v526
        %v529 = vsel %vm527, %v526, %v524
        %s530 = scalar_lea.vmem %s7, 14
        %v531 = vld [vmem:[%s530] sm:$0x3]
        %v533 = vlaneseq
        %v534 = vshrl.u32 %v533, 7
        %v535 = vsub.s32 0, %v534
        %v536 = vrot.slane %v531, %v535
        %v537 = vlaneseq
        %v538 = vshrl.u32 %v537, 7
        %v539 = vsub.s32 1, %v538
        %v540 = vrot.slane %v531, %v539
        %v543 = vmul.f32 %v528, %v536
        %v544 = vmul.f32 %v529, %v540
        %545 = vrot.lane.b32.xlu0 %v388, 111
        %v546 = vpop.permute.xlu0 %545
        %547 = vrot.lane.b32.xlu0 %v389, 111
        %v548 = vpop.permute.xlu0 %547
        %vm549 = vcmp.lt.s32.totalorder %v395, 111
        %v550 = vsel %vm549, %v546, %v548
        %v551 = vsel %vm549, %v548, %v546
        %s552 = scalar_lea.vmem %s7, 16
        %v553 = vld [vmem:[%s552] sm:$0x3]
        %v555 = vlaneseq
        %v556 = vshrl.u32 %v555, 7
        %v557 = vsub.s32 0, %v556
        %v558 = vrot.slane %v553, %v557
        %v559 = vlaneseq
        %v560 = vshrl.u32 %v559, 7
        %v561 = vsub.s32 1, %v560
        %v562 = vrot.slane %v553, %v561
        %v565 = vmul.f32 %v550, %v558
        %v566 = vmul.f32 %v551, %v562
        %v567 = vld [vmem:[%s3] sm:$0xf]
        %v568 = vpack.c.bf16 %v433, %v411
        %v569 = vpack.c.bf16 %v434, %v412
        %v570 = vpack.c.bf16 %v477, %v455
        %v571 = vpack.c.bf16 %v478, %v456
        %v572 = vpack.c.bf16 %v499, %v388
        %v573 = vpack.c.bf16 %v500, %v389
        %v574 = vpack.c.bf16 %v543, %v521
        %v575 = vpack.c.bf16 %v544, %v522
        %v576 = vpack.c.bf16 %v565, %v565
        %v577 = vpack.c.bf16 %v566, %v566
        %v578 = vld [vmem:[%s4] sm:$0xff]
        %580 = vset.pattern.permute.xlu0 0
        %581 = vperm.xlu0 %580, %v578
        %v582 = vpop.permute.xlu0 %581
        %vm584 = vcmask 588800
        %v586 = vsel %vm584, %v567, 0
        %v589 = vsel %vm340, %v576, 0
        %v592 = vsel %vm340, %v577, 0
        %594 = vmatprep.subr.bf16.mxu0 %v569
        %595 = vmatpush1.bf16.msra.mxu0 %v568
        %596 = vmatprep.subr.bf16.mxu0 %v571
        %597 = vmatpush1.bf16.msra.mxu0 %v570
        %598 = vmatprep.subr.bf16.mxu0 %v573
        %599 = vmatpush1.bf16.msra.mxu0 %v572
        %600 = vmatprep.subr.bf16.mxu0 %v575
        %601 = vmatpush1.bf16.msra.mxu0 %v574
        %602 = vmatprep.subr.bf16.mxu0 %v592
        %603 = vmatpush1.bf16.msra.mxu0 %v589
        %604 = vmatprep.subr.bf16.mxu0 0
        %605 = vmatpush1.bf16.msra.mxu0 0
        %606 = vmatprep.subr.bf16.mxu0 0
        %607 = vmatpush1.bf16.msra.mxu0 0
        %608 = vmatprep.subr.bf16.mxu0 0
        %609 = vmatpush1.bf16.msra.mxu0 0
        %610 = vmatprep.subr.bf16.mxu0 0
        %611 = vmatpush1.bf16.msra.mxu0 0
        %612 = vmatprep.subr.bf16.mxu0 0
        %613 = vmatpush1.bf16.msra.mxu0 0
        %614 = vmatprep.subr.bf16.mxu0 0
        %615 = vmatpush1.bf16.msra.mxu0 0
        %616 = vmatprep.subr.bf16.mxu0 0
        %617 = vmatpush1.bf16.msra.mxu0 0
        %618 = vmatprep.subr.bf16.mxu0 0
        %619 = vmatpush1.bf16.msra.mxu0 0
        %620 = vmatprep.subr.bf16.mxu0 0
        %621 = vmatpush1.bf16.msra.mxu0 0
        %622 = vmatprep.subr.bf16.mxu0 0
        %623 = vmatpush1.bf16.msra.mxu0 0
        %624 = vmatprep.subr.bf16.mxu0 0
        %625 = vmatpush1.bf16.msra.mxu0 0
        %626 = vmatprep.mubr.bf16.mxu0 0
        %627 = vmatmul.mubr.bf16.gmra.mrb[0].mxu0 %v586
        %v628 = vpop.f32.mrb[0].mxu0
        %v629 = vadd.f32 %v582, %v628
        %v630 = vpop.f32.mrb[0].mxu0
        %v631 = vadd.f32 %v582, %v630
        %v632 = vpop.f32.mrb[0].mxu0
        %v633 = vpop.f32.mrb[0].mxu0
        %634 = vdwg.mxu0
        %v635 = vmax.f32 %v629, 0.0
        %v636 = vmax.f32 %v631, 0.0
        %v637 = vld [vmem:[%s5] sm:$0xf]
        %v638 = vpack.c.bf16 %v635, %v635
        %v639 = vpack.c.bf16 %v636, %v636
        %v640 = vld [vmem:[%s6] sm:$0xff]
        %642 = vset.pattern.permute.xlu0 0
        %643 = vperm.xlu0 %642, %v640
        %v644 = vpop.permute.xlu0 %643
        %v647 = vsel %vm336, %v637, 0
        %v650 = vsel %vm340, %v638, 0
        %v653 = vsel %vm340, %v639, 0
        %655 = vmatprep.subr.bf16.mxu0 %v653
        %656 = vmatpush1.bf16.msra.mxu0 %v650
        %657 = vmatprep.subr.bf16.mxu0 0
        %658 = vmatpush1.bf16.msra.mxu0 0
        %659 = vmatprep.subr.bf16.mxu0 0
        %660 = vmatpush1.bf16.msra.mxu0 0
        %661 = vmatprep.subr.bf16.mxu0 0
        %662 = vmatpush1.bf16.msra.mxu0 0
        %663 = vmatprep.subr.bf16.mxu0 0
        %664 = vmatpush1.bf16.msra.mxu0 0
        %665 = vmatprep.subr.bf16.mxu0 0
        %666 = vmatpush1.bf16.msra.mxu0 0
        %667 = vmatprep.subr.bf16.mxu0 0
        %668 = vmatpush1.bf16.msra.mxu0 0
        %669 = vmatprep.subr.bf16.mxu0 0
        %670 = vmatpush1.bf16.msra.mxu0 0
        %671 = vmatprep.subr.bf16.mxu0 0
        %672 = vmatpush1.bf16.msra.mxu0 0
        %673 = vmatprep.subr.bf16.mxu0 0
        %674 = vmatpush1.bf16.msra.mxu0 0
        %675 = vmatprep.subr.bf16.mxu0 0
        %676 = vmatpush1.bf16.msra.mxu0 0
        %677 = vmatprep.subr.bf16.mxu0 0
        %678 = vmatpush1.bf16.msra.mxu0 0
        %679 = vmatprep.subr.bf16.mxu0 0
        %680 = vmatpush1.bf16.msra.mxu0 0
        %681 = vmatprep.subr.bf16.mxu0 0
        %682 = vmatpush1.bf16.msra.mxu0 0
        %683 = vmatprep.subr.bf16.mxu0 0
        %684 = vmatpush1.bf16.msra.mxu0 0
        %685 = vmatprep.subr.bf16.mxu0 0
        %686 = vmatpush1.bf16.msra.mxu0 0
        %687 = vmatprep.mubr.bf16.mxu0 0
        %688 = vmatmul.mubr.bf16.gmra.mrb[0].mxu0 %v647
        %v689 = vpop.f32.mrb[0].mxu0
        %v690 = vadd.f32 %v644, %v689
        %v691 = vpop.f32.mrb[0].mxu0
        %v692 = vadd.f32 %v644, %v691
        %v693 = vpop.f32.mrb[0].mxu0
        %v694 = vpop.f32.mrb[0].mxu0
        %695 = vdwg.mxu0
        %v696 = vadd.f32 %v690, %v325
        %v697 = vadd.f32 %v692, %v326
        %698 = vst [vmem:[%s321] sm:$0xff] %v696
        %699 = vst [vmem:[%s321 + $0x8] sm:$0xff] %v697
        %s700 = sand.u32 %s206, 1
        %s701 = scalar_lea.sflag [#allocation4], %s700
        %s702 = sand.u32 %s206, 1
        %s703 = smul.addr %s702, 16
        %s704 = scalar_lea.vmem [#allocation5], %s703
        // Predicated region
        $region57: #{tpu_custom_call.1} parent=51 // pred_check
          %p705 = pneg %p216
        $region58: #{tpu_custom_call.1} parent=51 // pred_check_branch
          %707 = sbr.rel (%p705) target = $region60
        $region59: #{tpu_custom_call.1} parent=51 // pred_region
          %s708 = smul.u32 2, %s25
          %s710 = ssub.s32 256, 256
          %711 = vsyncadd %s701, %s710
          %s712 = smul.addr %s708, 128
          %s713 = scalar_lea.hbm %s8, %s712
          %s715 = sshll.u32 %s704, 4
          %s716 = int_to_ptr.vmem [resolvable:$true] %s715
          %718 = dma.vmem_to_hbm [thread:$0]  %s716, 256, %s713, %s701
        $region60: #{tpu_custom_call.1} parent=51 // pred_fallthru
          _
      $region52: #{tpu_custom_call.1} parent=5 // pred_fallthru
        _
      %p719 = scmp.le.s32.totalorder 2, %s20
      // Predicated region
      $region61: #{tpu_custom_call.1} parent=5 // pred_check
        %p720 = pneg %p719
      $region62: #{tpu_custom_call.1} parent=5 // pred_check_branch
        %722 = sbr.rel (%p720) target = $region64
      $region63: #{tpu_custom_call.1} parent=5 // pred_region
        %s723 = ssub.s32 %s20, 2
        // Predicated region
        $region65: #{tpu_custom_call.1} parent=63 // pred_check
          %p724 = pneg %p222
        $region66: #{tpu_custom_call.1} parent=63 // pred_check_branch
          %726 = sbr.rel (%p724) target = $region68
        $region67: #{tpu_custom_call.1} parent=63 // pred_region
          %s727 = sand.u32 %s207, 1
          %s728 = scalar_lea.sflag [#allocation4], %s727
          %s729 = sand.u32 %s207, 1
          %s730 = smul.addr %s729, 16
          %s731 = scalar_lea.vmem [#allocation5], %s730
          %732 = dma.done %s728, 256
        $region68: #{tpu_custom_call.1} parent=63 // pred_fallthru
          _
      $region64: #{tpu_custom_call.1} parent=5 // pred_fallthru
        _
    $region6: #{tpu_custom_call.1} parent=1 // loop_footer
      %s24 = sadd.s32 1, %s20
    $region7: #{tpu_custom_call.1} parent=1 // loop_footer_branch
      %19 = sbr.rel target = $region3
    $region8: #{tpu_custom_call.1} parent=1 // loop_exit
      _
    %733 = vsyncpa [#allocation3], 1
    %s734 = scalar_lea.sflag [#allocation3], 1
    %735 = vsyncpa %s734, 1
    %736 = vsyncpa [#allocation4], 1
    %s737 = scalar_lea.sflag [#allocation4], 1
    %738 = vsyncpa %s737, 1

</llo_original>
